<compile_context>
chip_gen: v7x
topology: tpu7x:2x2x1
jax: 0.10.0
libtpu: 0.0.40
codegen_flags: <defaults>
</compile_context>

<pallas_src>
import functools

import jax
import jax.numpy as jnp
from jax.experimental import pallas as pl
from jax.experimental.pallas import tpu as pltpu


def _round_up(x: int, m: int) -> int:
    return ((x + m - 1) // m) * m


# ---------------------------------------------------------------------------
# Kernels
# ---------------------------------------------------------------------------
def _linear_tiled_kernel(x_ref, w_ref, b_ref, o_ref):
    """Tiled y = x @ W^T + b.

    x_ref: (tm, tk), w_ref: (tk, tn) [weight already pre-transposed],
    b_ref: (1, tn),  o_ref: (tm, tn) f32.

    The output tile (block index (i, j)) is resident across the innermost k axis,
    so partial products (and the bias, at k == 0) accumulate directly into o_ref —
    no separate VMEM scratch, no epilogue copy.
    """
    k = pl.program_id(2)

    @pl.when(k == 0)
    def _():
        o_ref[...] = jnp.broadcast_to(b_ref[...], o_ref.shape).astype(o_ref.dtype)

    # Native MXU feed: contract LHS-last with RHS-first, f32 accumulation.
    o_ref[...] += jnp.dot(x_ref[...], w_ref[...], preferred_element_type=jnp.float32)


def _linear_single_block_kernel(x_ref, w_ref, b_ref, o_ref):
    """Whole-problem-in-VMEM fast path for tiny shapes (no grid, no batch padding)."""
    o_ref[...] = (
        jnp.dot(x_ref[...], w_ref[...], preferred_element_type=jnp.float32)
        + b_ref[...]
    )


# ---------------------------------------------------------------------------
# One-time parameter preprocessing (hoisted out of the forward path)
# ---------------------------------------------------------------------------
def prepare_linear_params(weight, bias):
    """Transpose + pad nn.Linear parameters once, at parameter-load time.

    weight: [OUT, IN] (PyTorch nn.Linear layout), bias: [OUT].
    Returns W^T zero-padded to (Kp, Np) and bias as (1, Np), with Kp/Np multiples
    of 128 (lane-dense), plus the true feature sizes for the forward wrapper.
    """
    OUT, IN = weight.shape
    Kp = _round_up(IN, 128)
    Np = _round_up(OUT, 128)

    w_t = jnp.asarray(weight, jnp.float32).T  # [IN, OUT]
    if Kp != IN or Np != OUT:
        w_p = jnp.pad(w_t, ((0, Kp - IN), (0, Np - OUT)))
    else:
        w_p = w_t

    b2d = jnp.asarray(bias, jnp.float32).reshape(1, OUT)
    b_p = jnp.pad(b2d, ((0, 0), (0, Np - OUT))) if Np != OUT else b2d

    return {"w_p": w_p, "b_p": b_p, "in_features": IN, "out_features": OUT}


# ---------------------------------------------------------------------------
# Forward
# ---------------------------------------------------------------------------
@functools.partial(jax.jit, static_argnames=("in_features", "out_features"))
def linear_forward(x, w_p, b_p, *, in_features, out_features):
    """Equivalent of nn.Linear(in_features, out_features)(x), f32.

    x:   [batch, in_features]
    w_p: [Kp, Np]  pre-transposed, zero-padded weight from prepare_linear_params
    b_p: [1, Np]   padded bias
    returns [batch, out_features]
    """
    B, IN = x.shape
    assert IN == in_features
    Kp, Np = w_p.shape
    OUT = out_features

    # ---- small-problem fast path: single block, no grid, no batch padding ----
    total_bytes = 4 * (B * Kp + Kp * Np + Np + B * Np)
    if (2 * B * IN * OUT) < (1 << 21) and total_bytes < (4 << 20):
        x_p = x if Kp == IN else jnp.pad(x, ((0, 0), (0, Kp - IN)))
        out = pl.pallas_call(
            _linear_single_block_kernel,
            out_shape=jax.ShapeDtypeStruct((B, Np), jnp.float32),
        )(x_p, w_p, b_p)
        return out[:, :OUT]

    # ---- tiled (M, N, K) path ----
    # tm: minimize batch padding.  tn/tk: largest tiles dividing the padded extents.
    if B <= 512:
        tm = _round_up(B, 8)
    else:
        tm = min((512, 256, 128), key=lambda t: _round_up(B, t) - B)
    Mp = _round_up(B, tm)

    tn = next(t for t in (512, 256, 128) if Np % t == 0)
    tk = next(t for t in (1024, 512, 256, 128) if Kp % t == 0)

    # v7x has two TensorCores: make sure the parallel (i, j) axes expose >= 2 tiles.
    if (Mp // tm) * (Np // tn) == 1 and tn >= 256:
        tn //= 2

    grid = (Mp // tm, Np // tn, Kp // tk)

    if Mp != B or Kp != IN:
        x_p = jnp.pad(x, ((0, Mp - B), (0, Kp - IN)))
    else:
        x_p = x

    cost = pl.CostEstimate(
        flops=2 * Mp * Kp * Np,
        transcendentals=0,
        bytes_accessed=4 * (
            Mp * Kp * (Np // tn)      # x is re-streamed once per N tile
            + Kp * Np * (Mp // tm)    # W is re-streamed once per M tile
            + Mp * Np                 # output written once
        ),
    )

    out_padded = pl.pallas_call(
        _linear_tiled_kernel,
        out_shape=jax.ShapeDtypeStruct((Mp, Np), jnp.float32),
        grid_spec=pltpu.PrefetchScalarGridSpec(
            num_scalar_prefetch=0,
            grid=grid,
            in_specs=[
                pl.BlockSpec((tm, tk), lambda i, j, k: (i, k)),   # x tile
                pl.BlockSpec((tk, tn), lambda i, j, k: (k, j)),   # W^T tile (streamed)
                pl.BlockSpec((1, tn), lambda i, j, k: (0, j)),    # bias (resident over k)
            ],
            out_specs=pl.BlockSpec((tm, tn), lambda i, j, k: (i, j)),
        ),
        compiler_params=pltpu.CompilerParams(
            dimension_semantics=("parallel", "parallel", "arbitrary"),
            # <= 48 MiB: safe on v7x (64 MiB physical VMEM / TC), plenty on v5e/v6e.
            vmem_limit_bytes=48 * 1024 * 1024,
        ),
        cost_estimate=cost,
    )(x_p, w_p, b_p)

    return out_padded[:B, :OUT]


if __name__ == "__main__":
    key = jax.random.PRNGKey(0)
    kx, kw, kb, kx2, kw2, kb2 = jax.random.split(key, 6)

    # --- small shapes consistent with the module: input_size=32, output_size=8 ---
    batch, input_size, output_size = 8, 32, 8
    bound = 1.0 / jnp.sqrt(jnp.float32(input_size))
    weight = jax.random.uniform(kw, (output_size, input_size), jnp.float32,
                                minval=-bound, maxval=bound)
    bias = jax.random.uniform(kb, (output_size,), jnp.float32,
                              minval=-bound, maxval=bound)
    x = jax.random.normal(kx, (batch, input_size), dtype=jnp.float32)

    # TODO(synk): LinearRegression.load() (torch.load of a state dict from disk) has
    # no Pallas equivalent; parameters are generated in-script instead.
    params = prepare_linear_params(weight, bias)   # one-time, outside the forward path
    out = linear_forward(
        x, params["w_p"], params["b_p"],
        in_features=params["in_features"], out_features=params["out_features"],
    )
    out = jax.block_until_ready(out)

    ref = x @ weight.T + bias
    assert out.shape == (batch, output_size)
    assert jnp.allclose(out, ref, atol=1e-5, rtol=1e-5), "small-case mismatch vs reference"

    # --- larger case exercising the tiled (M, N, K) path ---
    B2, IN2, OUT2 = 260, 640, 384
    bound2 = 1.0 / jnp.sqrt(jnp.float32(IN2))
    w2 = jax.random.uniform(kw2, (OUT2, IN2), jnp.float32, minval=-bound2, maxval=bound2)
    b2 = jax.random.uniform(kb2, (OUT2,), jnp.float32, minval=-bound2, maxval=bound2)
    x2 = jax.random.normal(kx2, (B2, IN2), dtype=jnp.float32)

    p2 = prepare_linear_params(w2, b2)
    out2 = linear_forward(
        x2, p2["w_p"], p2["b_p"],
        in_features=p2["in_features"], out_features=p2["out_features"],
    )
    out2 = jax.block_until_ready(out2)

    ref2 = x2 @ w2.T + b2
    assert out2.shape == (B2, OUT2)
    assert jnp.allclose(out2, ref2, atol=1e-4, rtol=1e-4), "tiled-case mismatch vs reference"

    print("KERNEL_OK")
</pallas_src>

<mosaic_0001>
module attributes {stable_mosaic.version = 11 : i64} {
  func.func @_linear_single_block_kernel(%arg0: memref<8x128xf32, #tpu.memory_space<vmem>>, %arg1: memref<128x128xf32, #tpu.memory_space<vmem>>, %arg2: memref<1x128xf32, #tpu.memory_space<vmem>>, %arg3: memref<8x128xf32, #tpu.memory_space<vmem>>) attributes {dimension_semantics = [], scalar_prefetch = 0 : i64, scratch_operands = 0 : i64, tpu.core_type = #tpu.core_type<tc>} {
    %c0 = arith.constant 0 : index
    %c0_0 = arith.constant 0 : index
    %0 = vector.load %arg0[%c0, %c0_0] : memref<8x128xf32, #tpu.memory_space<vmem>>, vector<8x128xf32>
    %c0_1 = arith.constant 0 : index
    %c0_2 = arith.constant 0 : index
    %1 = vector.load %arg1[%c0_1, %c0_2] : memref<128x128xf32, #tpu.memory_space<vmem>>, vector<128x128xf32>
    %cst = arith.constant dense<0.000000e+00> : vector<8x128xf32>
    %2 = tpu.matmul %0, %1, %cst {dimension_numbers = #tpu.dot_dimension_numbers<[1], [0], [0], [1], [0, 0, 1, 1], [], []>} : vector<8x128xf32>, vector<128x128xf32>, vector<8x128xf32> -> vector<8x128xf32>
    %c0_3 = arith.constant 0 : index
    %c0_4 = arith.constant 0 : index
    %3 = vector.load %arg2[%c0_3, %c0_4] : memref<1x128xf32, #tpu.memory_space<vmem>>, vector<1x128xf32>
    %4 = vector.broadcast %3 : vector<1x128xf32> to vector<8x128xf32>
    %5 = arith.addf %2, %4 : vector<8x128xf32>
    %c0_5 = arith.constant 0 : index
    %c0_6 = arith.constant 0 : index
    %6 = vector.load %arg3[%c0_5, %c0_6] : memref<8x128xf32, #tpu.memory_space<vmem>>, vector<8x128xf32>
    tpu.vector_store %arg3[%c0_5, %c0_6], %5 {strides = array<i32>} : memref<8x128xf32, #tpu.memory_space<vmem>>, vector<8x128xf32>,
    return
  }
}

</mosaic_0001>

<llo_original>
// kernel: linear_forward.1
$region0: #{linear_forward.1}
  #allocation0 [shape = 'u32[]', space=smem, size = 0x4, offset = 0x4, fixed_abs, tag = 'smem constant byte address 0x4 - core index']
  #allocation1 [shape = 'u32[144,128]{1,0:T(1,128)}', space=vmem, size = 0x12000, scoped, tag = 'internal scratch']
  %s0 = inlined_call_operand.vmem [shape: f32[8,128], index: 0, kind: input, shape index: {}]
  %s1 = inlined_call_operand.hbm [shape: f32[128,128], index: 1, kind: input, shape index: {}]
  %s2 = inlined_call_operand.vmem [shape: f32[1,128], index: 2, kind: input, shape index: {}]
  %s3 = inlined_call_operand.hbm [shape: f32[8,128], index: 3, kind: output, shape index: {}]
  %s4 = sld [smem:[#allocation0]]
  $region26: #{linear_forward.1} parent=0
    _
  %s6 = ssub.s32 1, %s4
  %s7 = scalar_select 0, %s6, %s4
  $region1: #{linear_forward.1} parent=0
    #allocation2 [shape = 'u8[65536]{0}', space=vmem, size = 0x10000, scoped, tag = 'input window, operand 1, single buffered']
    #allocation3 [shape = 's32[1]{0}', space=sflag, size = 0x4, scoped, tag = 'scoped memory for linear_forward.1']
    #allocation4 [shape = 's32[1]{0}', space=sflag, size = 0x4, scoped, tag = 'scoped memory for linear_forward.1']
    #allocation5 [shape = 'u8[4096]{0}', space=vmem, size = 0x1000, scoped, tag = 'output window, operand 0, single buffered']
    %8 = vsyncpa [#allocation3], 0
    %9 = vsyncpa [#allocation4], 0
    // Predicated region
    $region2: #{linear_forward.1} parent=1 // pred_check
      _
    $region3: #{linear_forward.1} parent=1 // pred_check_branch
      %11 = sbr.rel (0) target = $region5
    $region4: #{linear_forward.1} parent=1 // pred_region
      _
    $region5: #{linear_forward.1} parent=1 // pred_fallthru
      _
    // Predicated region
    $region6: #{linear_forward.1} parent=1 // pred_check
      _
    $region7: #{linear_forward.1} parent=1 // pred_check_branch
      %13 = sbr.rel (0) target = $region9
    $region8: #{linear_forward.1} parent=1 // pred_region
      %s15 = ssub.s32 2048, 2048
      %16 = vsyncadd [#allocation3], %s15
      %s17 = sshll.u32 [#allocation2], 4
      %s18 = int_to_ptr.vmem [resolvable:$true] %s17
      %23 = dma.hbm_to_vmem [thread:$0]  %s1, 2048, %s18, [#allocation3], 128, 128, 8
    $region9: #{linear_forward.1} parent=1 // pred_fallthru
      _
    // Predicated region
    $region10: #{linear_forward.1} parent=1 // pred_check
      _
    $region11: #{linear_forward.1} parent=1 // pred_check_branch
      %25 = sbr.rel (0) target = $region13
    $region12: #{linear_forward.1} parent=1 // pred_region
      _
    $region13: #{linear_forward.1} parent=1 // pred_fallthru
      _
    // Predicated region
    $region14: #{linear_forward.1} parent=1 // pred_check
      _
    $region15: #{linear_forward.1} parent=1 // pred_check_branch
      %27 = sbr.rel (0) target = $region17
    $region16: #{linear_forward.1} parent=1 // pred_region
      %28 = dma.done [#allocation3], 2048
    $region17: #{linear_forward.1} parent=1 // pred_fallthru
      _
    %v29 = vld [vmem:[%s0] sm:$0xff]
    %v30 = vld [vmem:[#allocation2] sm:$0xff]
    %v31 = vld [vmem:[#allocation2 + $0x8] sm:$0xff]
    %v32 = vld [vmem:[#allocation2 + $0x10] sm:$0xff]
    %v33 = vld [vmem:[#allocation2 + $0x18] sm:$0xff]
    %v34 = vld [vmem:[#allocation2 + $0x20] sm:$0xff]
    %v35 = vld [vmem:[#allocation2 + $0x28] sm:$0xff]
    %v36 = vld [vmem:[#allocation2 + $0x30] sm:$0xff]
    %v37 = vld [vmem:[#allocation2 + $0x38] sm:$0xff]
    %v38 = vld [vmem:[#allocation2 + $0x40] sm:$0xff]
    %v39 = vld [vmem:[#allocation2 + $0x48] sm:$0xff]
    %v40 = vld [vmem:[#allocation2 + $0x50] sm:$0xff]
    %v41 = vld [vmem:[#allocation2 + $0x58] sm:$0xff]
    %v42 = vld [vmem:[#allocation2 + $0x60] sm:$0xff]
    %v43 = vld [vmem:[#allocation2 + $0x68] sm:$0xff]
    %v44 = vld [vmem:[#allocation2 + $0x70] sm:$0xff]
    %v45 = vld [vmem:[#allocation2 + $0x78] sm:$0xff]
    %v46 = vld [vmem:[%s2] sm:$0x1]
    %v48 = vlaneseq
    %v49 = vshrl.u32 %v48, 7
    %v50 = vsub.s32 0, %v49
    %v51 = vrot.slane %v46, %v50
    %53 = vmatprep.subr.mxu0 0.0
    %54 = vmatpush1.msra.mxu0 %v30
    %55 = vmatprep.subr.mxu0 0.0
    %56 = vmatpush1.msra.mxu0 %v31
    %57 = vmatprep.subr.mxu0 0.0
    %58 = vmatpush1.msra.mxu0 %v32
    %59 = vmatprep.subr.mxu0 0.0
    %60 = vmatpush1.msra.mxu0 %v33
    %61 = vmatprep.subr.mxu0 0.0
    %62 = vmatpush1.msra.mxu0 %v34
    %63 = vmatprep.subr.mxu0 0.0
    %64 = vmatpush1.msra.mxu0 %v35
    %65 = vmatprep.subr.mxu0 0.0
    %66 = vmatpush1.msra.mxu0 %v36
    %67 = vmatprep.subr.mxu0 0.0
    %68 = vmatpush1.msra.mxu0 %v37
    %69 = vmatprep.subr.mxu0 0.0
    %70 = vmatpush1.msra.mxu0 %v38
    %71 = vmatprep.subr.mxu0 0.0
    %72 = vmatpush1.msra.mxu0 %v39
    %73 = vmatprep.subr.mxu0 0.0
    %74 = vmatpush1.msra.mxu0 %v40
    %75 = vmatprep.subr.mxu0 0.0
    %76 = vmatpush1.msra.mxu0 %v41
    %77 = vmatprep.subr.mxu0 0.0
    %78 = vmatpush1.msra.mxu0 %v42
    %79 = vmatprep.subr.mxu0 0.0
    %80 = vmatpush1.msra.mxu0 %v43
    %81 = vmatprep.subr.mxu0 0.0
    %82 = vmatpush1.msra.mxu0 %v44
    %83 = vmatprep.subr.mxu0 0.0
    %84 = vmatpush1.msra.mxu0 %v45
    %85 = vmatprep.subr.mxu0 0.0
    %86 = vmatpush1.msra.mxu0 0.0
    %87 = vmatprep.subr.mxu0 0.0
    %88 = vmatpush1.msra.mxu0 0.0
    %89 = vmatprep.subr.mxu0 0.0
    %90 = vmatpush1.msra.mxu0 0.0
    %91 = vmatprep.subr.mxu0 0.0
    %92 = vmatpush1.msra.mxu0 0.0
    %93 = vmatprep.subr.mxu0 0.0
    %94 = vmatpush1.msra.mxu0 0.0
    %95 = vmatprep.subr.mxu0 0.0
    %96 = vmatpush1.msra.mxu0 0.0
    %97 = vmatprep.subr.mxu0 0.0
    %98 = vmatpush1.msra.mxu0 0.0
    %99 = vmatprep.subr.mxu0 0.0
    %100 = vmatpush1.msra.mxu0 0.0
    %101 = vmatprep.subr.mxu0 0.0
    %102 = vmatpush1.msra.mxu0 0.0
    %103 = vmatprep.subr.mxu0 0.0
    %104 = vmatpush1.msra.mxu0 0.0
    %105 = vmatprep.subr.mxu0 0.0
    %106 = vmatpush1.msra.mxu0 0.0
    %107 = vmatprep.subr.mxu0 0.0
    %108 = vmatpush1.msra.mxu0 0.0
    %109 = vmatprep.subr.mxu0 0.0
    %110 = vmatpush1.msra.mxu0 0.0
    %111 = vmatprep.subr.mxu0 0.0
    %112 = vmatpush1.msra.mxu0 0.0
    %113 = vmatprep.subr.mxu0 0.0
    %114 = vmatpush1.msra.mxu0 0.0
    %115 = vmatprep.subr.mxu0 0.0
    %116 = vmatpush1.msra.mxu0 0.0
    %117 = vmatprep.mubr.f32.mxu0 0.0
    %118 = vmatmul.mubr.f32.gmra.mrb[0].mxu0 %v29
    %v119 = vpop.f32.mrb[0].mxu0
    %v120 = vadd.f32 %v51, %v119
    %v121 = vpop.f32.mrb[0].mxu0
    %122 = vdwg.mxu0
    %123 = vst [vmem:[#allocation5] sm:$0xff] %v120
    // Predicated region
    $region18: #{linear_forward.1} parent=1 // pred_check
      _
    $region19: #{linear_forward.1} parent=1 // pred_check_branch
      %125 = sbr.rel (0) target = $region21
    $region20: #{linear_forward.1} parent=1 // pred_region
      %s127 = ssub.s32 128, 128
      %128 = vsyncadd [#allocation4], %s127
      %s130 = sshll.u32 [#allocation5], 4
      %s131 = int_to_ptr.vmem [resolvable:$true] %s130
      %133 = dma.vmem_to_hbm [thread:$0]  %s131, 128, %s3, [#allocation4]
    $region21: #{linear_forward.1} parent=1 // pred_fallthru
      _
    // Predicated region
    $region22: #{linear_forward.1} parent=1 // pred_check
      _
    $region23: #{linear_forward.1} parent=1 // pred_check_branch
      %135 = sbr.rel (0) target = $region25
    $region24: #{linear_forward.1} parent=1 // pred_region
      %136 = dma.done [#allocation4], 128
    $region25: #{linear_forward.1} parent=1 // pred_fallthru
      _
    %137 = vsyncpa [#allocation3], 1
    %138 = vsyncpa [#allocation4], 1

</llo_original>
